<compile_context>
chip_gen: v5e
topology: v5e:2x2
jax: 0.10.0
libtpu: 0.0.40
codegen_flags: <defaults>
</compile_context>

<pallas_src>
import jax
import jax.numpy as jnp
from jax.experimental import pallas as pl
from jax.experimental.pallas import tpu as pltpu

# Module constants hard-coded in BertGraphHead.__init__.
N_MLP = 100    # n_mlp_arc == n_mlp_rel
N_RELS = 20


def _round_up(n, m):
    return ((n + m - 1) // m) * m


# --------------------------------------------------------------------------
# Kernel 1: fused 4x (Linear + LeakyReLU) over the flattened token axis.
# --------------------------------------------------------------------------
def _mlp_kernel(x_ref, w_ref, b_ref, o_ref):
    # x_ref: [TM, H], w_ref: [H, 4*nm], b_ref: [1, 4*nm], o_ref: [TM, 4*nm]
    y = jnp.dot(x_ref[...], w_ref[...], preferred_element_type=jnp.float32)
    y = y + b_ref[...]
    # LeakyReLU(negative_slope=0.1), as used by the parser MLP head.
    o_ref[...] = jnp.where(y >= 0, y, 0.1 * y).astype(o_ref.dtype)


def fused_mlp(x2d, w_all, b_all, *, tm=512, compute_dtype=jnp.float32):
    """x2d: [M, H]; w_all: [H, 4*nm]; b_all: [4*nm] -> [M, 4*nm] float32."""
    M, H = x2d.shape
    N = w_all.shape[1]

    # Row-tile size: multiple of 8 (f32 sublane), padded M so every tile is full.
    TM = _round_up(min(tm, M), 8)
    M_pad = _round_up(M, TM)
    if M_pad != M:
        x2d = jnp.pad(x2d, ((0, M_pad - M), (0, 0)))

    # Optional bf16 streaming of the HBM-bound x read (f32 accumulation on MXU).
    x2d = x2d.astype(compute_dtype)
    w_all = w_all.astype(compute_dtype)
    b2d = b_all.reshape(1, N).astype(jnp.float32)

    itm = jnp.dtype(compute_dtype).itemsize
    est = 2 * (TM * H + H * N) * itm + 2 * (TM * N + N) * 4 + (1 << 20)
    vmem = int(min(48 << 20, max(32 << 20, 2 * est)))  # explicit, v7x-safe budget

    out = pl.pallas_call(
        _mlp_kernel,
        out_shape=jax.ShapeDtypeStruct((M_pad, N), jnp.float32),
        grid=(M_pad // TM,),
        in_specs=[
            pl.BlockSpec((TM, H), lambda i: (i, 0)),   # streamed x tiles (auto double-buffered)
            pl.BlockSpec((H, N), lambda i: (0, 0)),    # resident fused weight
            pl.BlockSpec((1, N), lambda i: (0, 0)),    # resident fused bias
        ],
        out_specs=pl.BlockSpec((TM, N), lambda i: (i, 0)),
        compiler_params=pltpu.CompilerParams(
            dimension_semantics=("parallel",),
            vmem_limit_bytes=vmem,
        ),
    )(x2d, w_all, b2d)
    return out[:M]


# --------------------------------------------------------------------------
# Kernel 2: arc + rel biaffine scores, one batch element per grid step.
# --------------------------------------------------------------------------
def _biaffine_kernel(arcd_ref, arch_ref, reld_ref, relh_ref, wa_ref, wr_ref,
                     sarc_ref, srel_ref):
    f32 = jnp.float32
    # Arc scores: s_arc[x, y] = sum_ij arc_d_aug[x, i] * W_arc[i, j] * arc_h[y, j]
    arc_t = jnp.dot(arcd_ref[...], wa_ref[...], preferred_element_type=f32)     # [S, nm]
    sarc_ref[...] = jax.lax.dot_general(
        arc_t, arch_ref[...], (((1,), (1,)), ((), ())),
        preferred_element_type=f32).astype(sarc_ref.dtype)

    # Rel scores: s_rel[o, x, y] = sum_ij rel_d_aug[x, i] * W_rel[o, i, j] * rel_h_aug[y, j]
    reld = reld_ref[...]
    relh = relh_ref[...]
    for o in range(srel_ref.shape[0]):                                          # static unroll (n_rels = 20)
        t = jnp.dot(reld, wr_ref[o], preferred_element_type=f32)                # [S, nm+1]
        srel_ref[o] = jax.lax.dot_general(
            t, relh, (((1,), (1,)), ((), ())),
            preferred_element_type=f32).astype(srel_ref.dtype)


def biaffine_scores(arc_d_aug, arc_h, rel_d_aug, rel_h_aug, w_arc, w_rel):
    """Returns (s_arc [B,S,S], s_rel [B,n_rels,S,S])."""
    B, S, nm1 = arc_d_aug.shape
    nm = arc_h.shape[-1]
    n_rels = w_rel.shape[0]

    est = 2 * 4 * (3 * S * nm1 + S * nm + nm1 * nm + n_rels * nm1 * nm1
                   + S * S + n_rels * S * S) + (1 << 20)
    vmem = int(min(48 << 20, max(32 << 20, 2 * est)))

    return pl.pallas_call(
        _biaffine_kernel,
        out_shape=(
            jax.ShapeDtypeStruct((B, S, S), jnp.float32),
            jax.ShapeDtypeStruct((B, n_rels, S, S), jnp.float32),
        ),
        grid=(B,),
        in_specs=[
            pl.BlockSpec((None, S, nm1), lambda b: (b, 0, 0)),      # arc_d ⊕ 1
            pl.BlockSpec((None, S, nm), lambda b: (b, 0, 0)),       # arc_h
            pl.BlockSpec((None, S, nm1), lambda b: (b, 0, 0)),      # rel_d ⊕ 1
            pl.BlockSpec((None, S, nm1), lambda b: (b, 0, 0)),      # rel_h ⊕ 1
            pl.BlockSpec((nm1, nm), lambda b: (0, 0)),              # resident W_arc
            pl.BlockSpec((n_rels, nm1, nm1), lambda b: (0, 0, 0)),  # resident W_rel
        ],
        out_specs=(
            pl.BlockSpec((None, S, S), lambda b: (b, 0, 0)),
            pl.BlockSpec((None, n_rels, S, S), lambda b: (b, 0, 0, 0)),
        ),
        compiler_params=pltpu.CompilerParams(
            dimension_semantics=("parallel",),
            vmem_limit_bytes=vmem,
        ),
    )(arc_d_aug, arc_h, rel_d_aug, rel_h_aug, w_arc, w_rel)


# --------------------------------------------------------------------------
# Full BertGraphHead.forward
# --------------------------------------------------------------------------
def bert_graph_head(x, mask, params, *, tm=512, compute_dtype=jnp.float32):
    """x: [B, S, H] f32; mask: [B, S] bool or None.

    Returns (s_arc [B, S, S], s_rel [B, S, S, n_rels]).
    """
    B, S, H = x.shape
    nm = N_MLP

    feats = fused_mlp(x.reshape(B * S, H), params["w_mlp"], params["b_mlp"],
                      tm=tm, compute_dtype=compute_dtype)
    feats = feats.reshape(B, S, 4 * nm)
    arc_h = feats[..., 0 * nm:1 * nm]
    arc_d = feats[..., 1 * nm:2 * nm]
    rel_h = feats[..., 2 * nm:3 * nm]
    rel_d = feats[..., 3 * nm:4 * nm]

    ones = jnp.ones((B, S, 1), feats.dtype)
    arc_d_aug = jnp.concatenate([arc_d, ones], axis=-1)   # Biaffine bias_x=True
    rel_d_aug = jnp.concatenate([rel_d, ones], axis=-1)   # Biaffine bias_x=True
    rel_h_aug = jnp.concatenate([rel_h, ones], axis=-1)   # Biaffine bias_y=True

    s_arc, s_rel_o = biaffine_scores(arc_d_aug, arc_h, rel_d_aug, rel_h_aug,
                                     params["w_arc"], params["w_rel"])
    s_rel = jnp.transpose(s_rel_o, (0, 2, 3, 1))          # .permute(0, 2, 3, 1)

    if mask is not None:
        # s_arc.masked_fill_(~mask.unsqueeze(1), float('-inf'))
        s_arc = jnp.where(mask[:, None, :], s_arc, -jnp.inf)
    return s_arc, s_rel


# --------------------------------------------------------------------------
# Pure-JAX reference for the correctness check.
# --------------------------------------------------------------------------
def reference_forward(x, mask, params):
    nm = N_MLP
    w, b = params["w_mlp"], params["b_mlp"]

    def mlp(xx, ww, bb):
        y = jnp.einsum("bsh,hn->bsn", xx, ww) + bb
        return jnp.where(y >= 0, y, 0.1 * y)

    arc_h = mlp(x, w[:, 0 * nm:1 * nm], b[0 * nm:1 * nm])
    arc_d = mlp(x, w[:, 1 * nm:2 * nm], b[1 * nm:2 * nm])
    rel_h = mlp(x, w[:, 2 * nm:3 * nm], b[2 * nm:3 * nm])
    rel_d = mlp(x, w[:, 3 * nm:4 * nm], b[3 * nm:4 * nm])

    ones = jnp.ones(x.shape[:-1] + (1,), x.dtype)
    arc_d_b = jnp.concatenate([arc_d, ones], -1)
    rel_d_b = jnp.concatenate([rel_d, ones], -1)
    rel_h_b = jnp.concatenate([rel_h, ones], -1)

    s_arc = jnp.einsum("bxi,ij,byj->bxy", arc_d_b, params["w_arc"], arc_h)
    s_rel = jnp.einsum("bxi,oij,byj->boxy", rel_d_b, params["w_rel"], rel_h_b)
    s_rel = jnp.transpose(s_rel, (0, 2, 3, 1))
    if mask is not None:
        s_arc = jnp.where(mask[:, None, :], s_arc, -jnp.inf)
    return s_arc, s_rel


if __name__ == "__main__":
    # Small deterministic shapes consistent with the module.
    B, S, H = 2, 8, 32                     # batch, seq, config.hidden_size
    nm, nm1, n_rels = N_MLP, N_MLP + 1, N_RELS

    key = jax.random.PRNGKey(0)
    k = jax.random.split(key, 6)

    # Synthetic deterministic parameters (not a checkpoint).
    bound = 1.0 / (H ** 0.5)
    w_mlp = jax.random.uniform(k[0], (H, 4 * nm), minval=-bound, maxval=bound,
                               dtype=jnp.float32)            # [arc_h | arc_d | rel_h | rel_d]
    b_mlp = jax.random.uniform(k[1], (4 * nm,), minval=-bound, maxval=bound,
                               dtype=jnp.float32)
    w_arc = 0.1 * jax.random.normal(k[2], (nm1, nm), dtype=jnp.float32)          # Biaffine(100, bias_x, !bias_y)
    w_rel = 0.1 * jax.random.normal(k[3], (n_rels, nm1, nm1), dtype=jnp.float32)  # Biaffine(100, 20, bias_x, bias_y)
    params = {"w_mlp": w_mlp, "b_mlp": b_mlp, "w_arc": w_arc, "w_rel": w_rel}

    x = jax.random.normal(k[4], (B, S, H), dtype=jnp.float32)
    mask = jax.random.uniform(k[5], (B, S)) > 0.3

    # Pallas path (with and without mask).
    s_arc, s_rel = bert_graph_head(x, mask, params)
    s_arc = jax.block_until_ready(s_arc)
    s_rel = jax.block_until_ready(s_rel)
    s_arc_nm, s_rel_nm = bert_graph_head(x, None, params)
    s_arc_nm = jax.block_until_ready(s_arc_nm)

    # Reference path.
    ref_arc, ref_rel = reference_forward(x, mask, params)
    ref_arc_nm, _ = reference_forward(x, None, params)

    # Shape checks.
    assert s_arc.shape == (B, S, S)
    assert s_rel.shape == (B, S, S, n_rels)

    # Numerical checks (tolerance accounts for MXU f32-vs-default-precision differences).
    tol = dict(rtol=5e-2, atol=1.5e-1)
    assert jnp.allclose(s_arc_nm, ref_arc_nm, **tol), "s_arc mismatch vs reference"
    assert jnp.allclose(s_rel, ref_rel, **tol), "s_rel mismatch vs reference"

    # Masked path: -inf exactly where ~mask, values elsewhere match the reference.
    inv = ~jnp.broadcast_to(mask[:, None, :], s_arc.shape)
    assert bool(jnp.all(jnp.where(inv, jnp.isneginf(s_arc), True))), "mask fill missing"
    assert jnp.allclose(jnp.where(inv, 0.0, s_arc), jnp.where(inv, 0.0, ref_arc), **tol)

    print("KERNEL_OK")
</pallas_src>

<mosaic_0001>
module attributes {stable_mosaic.version = 11 : i64} {
  func.func @_mlp_kernel(%arg0: i32, %arg1: memref<16x32xf32, #tpu.memory_space<vmem>>, %arg2: memref<32x400xf32, #tpu.memory_space<vmem>>, %arg3: memref<1x400xf32, #tpu.memory_space<vmem>>, %arg4: memref<16x400xf32, #tpu.memory_space<vmem>>) attributes {dimension_semantics = [#tpu.dimension_semantics<parallel>], iteration_bounds = array<i64: 1>, scalar_prefetch = 0 : i64, scratch_operands = 0 : i64, tpu.core_type = #tpu.core_type<tc>, window_params = [{transform_indices = @transform_0, window_bounds = array<i64: 16, 32>}, {pipeline_mode = #tpu.pipeline_mode<synchronous>, transform_indices = @transform_1, window_bounds = array<i64: 32, 400>}, {pipeline_mode = #tpu.pipeline_mode<synchronous>, transform_indices = @transform_2, window_bounds = array<i64: 1, 400>}, {transform_indices = @transform_3, window_bounds = array<i64: 16, 400>}]} {
    %c0 = arith.constant 0 : index
    %c0_0 = arith.constant 0 : index
    %0 = vector.load %arg1[%c0, %c0_0] : memref<16x32xf32, #tpu.memory_space<vmem>>, vector<16x32xf32>
    %c0_1 = arith.constant 0 : index
    %c0_2 = arith.constant 0 : index
    %1 = vector.load %arg2[%c0_1, %c0_2] : memref<32x400xf32, #tpu.memory_space<vmem>>, vector<32x400xf32>
    %cst = arith.constant dense<0.000000e+00> : vector<16x400xf32>
    %2 = tpu.matmul %0, %1, %cst {dimension_numbers = #tpu.dot_dimension_numbers<[1], [0], [0], [1], [0, 0, 1, 1], [], []>} : vector<16x32xf32>, vector<32x400xf32>, vector<16x400xf32> -> vector<16x400xf32>
    %c0_3 = arith.constant 0 : index
    %c0_4 = arith.constant 0 : index
    %3 = vector.load %arg3[%c0_3, %c0_4] : memref<1x400xf32, #tpu.memory_space<vmem>>, vector<1x400xf32>
    %4 = vector.broadcast %3 : vector<1x400xf32> to vector<16x400xf32>
    %5 = arith.addf %2, %4 : vector<16x400xf32>
    %cst_5 = arith.constant 0.000000e+00 : f32
    %6 = vector.broadcast %cst_5 : f32 to vector<16x400xf32>
    %7 = arith.cmpf oge, %5, %6 : vector<16x400xf32>
    %cst_6 = arith.constant 1.000000e-01 : f32
    %8 = vector.broadcast %cst_6 : f32 to vector<16x400xf32>
    %9 = arith.mulf %8, %5 : vector<16x400xf32>
    %10 = arith.select %7, %5, %9 : vector<16x400xi1>, vector<16x400xf32>
    %c0_7 = arith.constant 0 : index
    %c0_8 = arith.constant 0 : index
    %11 = vector.load %arg4[%c0_7, %c0_8] : memref<16x400xf32, #tpu.memory_space<vmem>>, vector<16x400xf32>
    tpu.vector_store %arg4[%c0_7, %c0_8], %10 {strides = array<i32>} : memref<16x400xf32, #tpu.memory_space<vmem>>, vector<16x400xf32>,
    return
  }
  func.func @transform_0(%arg0: i32) -> (i32, i32) {
    %c0_i32 = arith.constant 0 : i32
    %c0_i32_0 = arith.constant 0 : i32
    return %arg0, %c0_i32 : i32, i32
  }
  func.func @transform_1(%arg0: i32) -> (i32, i32) {
    %c0_i32 = arith.constant 0 : i32
    %c0_i32_0 = arith.constant 0 : i32
    %c0_i32_1 = arith.constant 0 : i32
    return %c0_i32, %c0_i32_0 : i32, i32
  }
  func.func @transform_2(%arg0: i32) -> (i32, i32) {
    %c0_i32 = arith.constant 0 : i32
    %c0_i32_0 = arith.constant 0 : i32
    %c0_i32_1 = arith.constant 0 : i32
    return %c0_i32, %c0_i32_0 : i32, i32
  }
  func.func @transform_3(%arg0: i32) -> (i32, i32) {
    %c0_i32 = arith.constant 0 : i32
    %c0_i32_0 = arith.constant 0 : i32
    return %arg0, %c0_i32 : i32, i32
  }
}

</mosaic_0001>

<llo_original>
// kernel: tpu_custom_call.1
$region0: #{tpu_custom_call.1}
  #allocation0 [shape = 'u32[]', space=smem, size = 0x4, offset = 0x4, fixed_abs, tag = 'smem constant byte address 0x4 - core index']
  #allocation1 [shape = 'u32[72,128]{1,0:T(1,128)}', space=vmem, size = 0x9000, scoped, tag = 'internal scratch']
  %s0 = inlined_call_operand.hbm [shape: f32[16,32], index: 0, kind: input, shape index: {}]
  %s1 = inlined_call_operand.hbm [shape: f32[32,400], index: 1, kind: input, shape index: {}]
  %s2 = inlined_call_operand.hbm [shape: f32[1,400], index: 2, kind: input, shape index: {}]
  %s3 = inlined_call_operand.hbm [shape: f32[16,400], index: 3, kind: output, shape index: {}]
  %s4 = sld [smem:[#allocation0]]
  $region34: #{tpu_custom_call.1} parent=0
    _
  %s6 = ssub.s32 1, %s4
  %s7 = scalar_select 0, %s6, %s4
  $region1: #{tpu_custom_call.1} parent=0
    #allocation2 [shape = 'u8[8192]{0}', space=vmem, size = 0x2000, scoped, tag = 'input window, operand 0, single buffered']
    #allocation3 [shape = 's32[1]{0}', space=sflag, size = 0x4, scoped, tag = 'scoped memory for tpu_custom_call.1']
    #allocation4 [shape = 's32[1]{0}', space=sflag, size = 0x4, scoped, tag = 'scoped memory for tpu_custom_call.1']
    #allocation5 [shape = 'u8[65536]{0}', space=vmem, size = 0x10000, scoped, tag = 'input window, operand 1, single buffered']
    #allocation6 [shape = 's32[1]{0}', space=sflag, size = 0x4, scoped, tag = 'scoped memory for tpu_custom_call.1']
    #allocation7 [shape = 'u8[2048]{0}', space=vmem, size = 0x800, scoped, tag = 'input window, operand 2, single buffered']
    #allocation8 [shape = 'u8[32768]{0}', space=vmem, size = 0x8000, scoped, tag = 'output window, operand 0, single buffered']
    %8 = vsyncpa [#allocation3], 0
    %9 = vsyncpa [#allocation6], 0
    %10 = vsyncpa [#allocation4], 0
    // Predicated region
    $region2: #{tpu_custom_call.1} parent=1 // pred_check
      _
    $region3: #{tpu_custom_call.1} parent=1 // pred_check_branch
      %12 = sbr.rel (0) target = $region5
    $region4: #{tpu_custom_call.1} parent=1 // pred_region
      %14 = vsyncadd [#allocation3], 0
      %s15 = sshll.u32 %s0, 4
      %s16 = int_to_ptr.hbm [resolvable:$true] %s15
      %s17 = sshll.u32 [#allocation2], 4
      %s18 = int_to_ptr.vmem [resolvable:$true] %s17
      %23 = dma.hbm_to_vmem [thread:$0]  %s16, 256, %s18, [#allocation3], 128, 128, 8
    $region5: #{tpu_custom_call.1} parent=1 // pred_fallthru
      _
    // Predicated region
    $region6: #{tpu_custom_call.1} parent=1 // pred_check
      _
    $region7: #{tpu_custom_call.1} parent=1 // pred_check_branch
      %25 = sbr.rel (0) target = $region9
    $region8: #{tpu_custom_call.1} parent=1 // pred_region
      %27 = vsyncadd [#allocation6], 0
      %s28 = sshll.u32 %s1, 4
      %s29 = int_to_ptr.hbm [resolvable:$true] %s28
      %s30 = sshll.u32 [#allocation5], 4
      %s31 = int_to_ptr.vmem [resolvable:$true] %s30
      %36 = dma.hbm_to_vmem [thread:$0]  %s29, 2048, %s31, [#allocation6], 512, 512, 32
    $region9: #{tpu_custom_call.1} parent=1 // pred_fallthru
      _
    // Predicated region
    $region10: #{tpu_custom_call.1} parent=1 // pred_check
      _
    $region11: #{tpu_custom_call.1} parent=1 // pred_check_branch
      %38 = sbr.rel (0) target = $region13
    $region12: #{tpu_custom_call.1} parent=1 // pred_region
      %40 = vsyncadd [#allocation6], 0
      %s42 = sshll.u32 %s2, 4
      %s43 = int_to_ptr.hbm [resolvable:$true] %s42
      %s44 = sshll.u32 [#allocation7], 4
      %s45 = int_to_ptr.vmem [resolvable:$true] %s44
      %47 = dma.hbm_to_vmem [thread:$0]  %s43, 64, %s45, [#allocation6]
    $region13: #{tpu_custom_call.1} parent=1 // pred_fallthru
      _
    // Predicated region
    $region14: #{tpu_custom_call.1} parent=1 // pred_check
      _
    $region15: #{tpu_custom_call.1} parent=1 // pred_check_branch
      %49 = sbr.rel (0) target = $region17
    $region16: #{tpu_custom_call.1} parent=1 // pred_region
      %51 = dma.done [#allocation3], 256
    $region17: #{tpu_custom_call.1} parent=1 // pred_fallthru
      _
    // Predicated region
    $region18: #{tpu_custom_call.1} parent=1 // pred_check
      _
    $region19: #{tpu_custom_call.1} parent=1 // pred_check_branch
      %53 = sbr.rel (0) target = $region21
    $region20: #{tpu_custom_call.1} parent=1 // pred_region
      %55 = dma.done [#allocation6], 2048
    $region21: #{tpu_custom_call.1} parent=1 // pred_fallthru
      _
    // Predicated region
    $region22: #{tpu_custom_call.1} parent=1 // pred_check
      _
    $region23: #{tpu_custom_call.1} parent=1 // pred_check_branch
      %57 = sbr.rel (0) target = $region25
    $region24: #{tpu_custom_call.1} parent=1 // pred_region
      %59 = dma.done [#allocation6], 64
    $region25: #{tpu_custom_call.1} parent=1 // pred_fallthru
      _
    %v60 = vld [vmem:[#allocation2] sm:$0xff]
    %v61 = vld [vmem:[#allocation2 + $0x8] sm:$0xff]
    %v62 = vld [vmem:[#allocation5] sm:$0xff]
    %v63 = vld [vmem:[#allocation5 + $0x8] sm:$0xff]
    %v64 = vld [vmem:[#allocation5 + $0x10] sm:$0xff]
    %v65 = vld [vmem:[#allocation5 + $0x18] sm:$0xff]
    %v66 = vld [vmem:[#allocation5 + $0x20] sm:$0xff]
    %v67 = vld [vmem:[#allocation5 + $0x28] sm:$0xff]
    %v68 = vld [vmem:[#allocation5 + $0x30] sm:$0xff]
    %v69 = vld [vmem:[#allocation5 + $0x38] sm:$0xff]
    %v70 = vld [vmem:[#allocation5 + $0x40] sm:$0xff]
    %v71 = vld [vmem:[#allocation5 + $0x48] sm:$0xff]
    %v72 = vld [vmem:[#allocation5 + $0x50] sm:$0xff]
    %v73 = vld [vmem:[#allocation5 + $0x58] sm:$0xff]
    %v74 = vld [vmem:[#allocation5 + $0x60] sm:$0xff]
    %v75 = vld [vmem:[#allocation5 + $0x68] sm:$0xff]
    %v76 = vld [vmem:[#allocation5 + $0x70] sm:$0xff]
    %v77 = vld [vmem:[#allocation5 + $0x78] sm:$0xff]
    %v78 = vld [vmem:[#allocation7] sm:$0xf]
    %v80 = vperm.slane %v78, 0
    %v81 = vperm.slane %v78, 1
    %v82 = vperm.slane %v78, 2
    %v83 = vperm.slane %v78, 3
    %vm88 = vcmask 261120
    %v90 = vsel %vm88, %v60, 0
    %v93 = vsel %vm88, %v61, 0
    %95 = vmatpush.msra.mxu0 0.0
    %96 = vmatpush.msra.mxu0 0.0
    %97 = vmatpush.msra.mxu0 0.0
    %98 = vmatpush.msra.mxu0 0.0
    %99 = vmatpush.msra.mxu0 0.0
    %100 = vmatpush.msra.mxu0 0.0
    %101 = vmatpush.msra.mxu0 0.0
    %102 = vmatpush.msra.mxu0 0.0
    %103 = vmatpush.msra.mxu0 0.0
    %104 = vmatpush.msra.mxu0 0.0
    %105 = vmatpush.msra.mxu0 0.0
    %106 = vmatpush.msra.mxu0 0.0
    %107 = vmatpush.msra.mxu0 %v74
    %108 = vmatpush.msra.mxu0 %v70
    %109 = vmatpush.msra.mxu0 %v66
    %110 = vmatpush.msra.mxu0 %v62
    %111 = vmatmul.f32.gmra.mxu0 %v90
    %v112 = vpop.f32.mrf.mxu0
    %v113 = vadd.f32 %v80, %v112
    %114 = vmatmul.f32.gmra.mxu0 %v93
    %v115 = vpop.f32.mrf.mxu0
    %v116 = vadd.f32 %v80, %v115
    %117 = vdwg.mxu0
    %118 = vmatpush.msra.mxu0 0.0
    %119 = vmatpush.msra.mxu0 0.0
    %120 = vmatpush.msra.mxu0 0.0
    %121 = vmatpush.msra.mxu0 0.0
    %122 = vmatpush.msra.mxu0 0.0
    %123 = vmatpush.msra.mxu0 0.0
    %124 = vmatpush.msra.mxu0 0.0
    %125 = vmatpush.msra.mxu0 0.0
    %126 = vmatpush.msra.mxu0 0.0
    %127 = vmatpush.msra.mxu0 0.0
    %128 = vmatpush.msra.mxu0 0.0
    %129 = vmatpush.msra.mxu0 0.0
    %130 = vmatpush.msra.mxu0 %v75
    %131 = vmatpush.msra.mxu0 %v71
    %132 = vmatpush.msra.mxu0 %v67
    %133 = vmatpush.msra.mxu0 %v63
    %134 = vmatmul.f32.gmra.mxu0 %v90
    %v135 = vpop.f32.mrf.mxu0
    %v136 = vadd.f32 %v81, %v135
    %137 = vmatmul.f32.gmra.mxu0 %v93
    %v138 = vpop.f32.mrf.mxu0
    %v139 = vadd.f32 %v81, %v138
    %140 = vdwg.mxu0
    %141 = vmatpush.msra.mxu0 0.0
    %142 = vmatpush.msra.mxu0 0.0
    %143 = vmatpush.msra.mxu0 0.0
    %144 = vmatpush.msra.mxu0 0.0
    %145 = vmatpush.msra.mxu0 0.0
    %146 = vmatpush.msra.mxu0 0.0
    %147 = vmatpush.msra.mxu0 0.0
    %148 = vmatpush.msra.mxu0 0.0
    %149 = vmatpush.msra.mxu0 0.0
    %150 = vmatpush.msra.mxu0 0.0
    %151 = vmatpush.msra.mxu0 0.0
    %152 = vmatpush.msra.mxu0 0.0
    %153 = vmatpush.msra.mxu0 %v76
    %154 = vmatpush.msra.mxu0 %v72
    %155 = vmatpush.msra.mxu0 %v68
    %156 = vmatpush.msra.mxu0 %v64
    %157 = vmatmul.f32.gmra.mxu0 %v90
    %v158 = vpop.f32.mrf.mxu0
    %v159 = vadd.f32 %v82, %v158
    %160 = vmatmul.f32.gmra.mxu0 %v93
    %v161 = vpop.f32.mrf.mxu0
    %v162 = vadd.f32 %v82, %v161
    %163 = vdwg.mxu0
    %164 = vmatpush.msra.mxu0 0.0
    %165 = vmatpush.msra.mxu0 0.0
    %166 = vmatpush.msra.mxu0 0.0
    %167 = vmatpush.msra.mxu0 0.0
    %168 = vmatpush.msra.mxu0 0.0
    %169 = vmatpush.msra.mxu0 0.0
    %170 = vmatpush.msra.mxu0 0.0
    %171 = vmatpush.msra.mxu0 0.0
    %172 = vmatpush.msra.mxu0 0.0
    %173 = vmatpush.msra.mxu0 0.0
    %174 = vmatpush.msra.mxu0 0.0
    %175 = vmatpush.msra.mxu0 0.0
    %176 = vmatpush.msra.mxu0 %v77
    %177 = vmatpush.msra.mxu0 %v73
    %178 = vmatpush.msra.mxu0 %v69
    %179 = vmatpush.msra.mxu0 %v65
    %180 = vmatmul.f32.gmra.mxu0 %v90
    %v181 = vpop.f32.mrf.mxu0
    %v182 = vadd.f32 %v83, %v181
    %183 = vmatmul.f32.gmra.mxu0 %v93
    %v184 = vpop.f32.mrf.mxu0
    %v185 = vadd.f32 %v83, %v184
    %186 = vdwg.mxu0
    %vm187 = vcmp.ge.f32.partialorder %v113, 0.0
    %vm188 = vcmp.ge.f32.partialorder %v136, 0.0
    %vm189 = vcmp.ge.f32.partialorder %v159, 0.0
    %vm190 = vcmp.ge.f32.partialorder %v182, 0.0
    %vm191 = vcmp.ge.f32.partialorder %v116, 0.0
    %vm192 = vcmp.ge.f32.partialorder %v139, 0.0
    %vm193 = vcmp.ge.f32.partialorder %v162, 0.0
    %vm194 = vcmp.ge.f32.partialorder %v185, 0.0
    %v195 = vmul.f32 %v113, 0.1
    %v196 = vmul.f32 %v136, 0.1
    %v197 = vmul.f32 %v159, 0.1
    %v198 = vmul.f32 %v182, 0.1
    %v199 = vmul.f32 %v116, 0.1
    %v200 = vmul.f32 %v139, 0.1
    %v201 = vmul.f32 %v162, 0.1
    %v202 = vmul.f32 %v185, 0.1
    %v203 = vsel %vm187, %v113, %v195
    %v204 = vsel %vm188, %v136, %v196
    %v205 = vsel %vm189, %v159, %v197
    %v206 = vsel %vm190, %v182, %v198
    %v207 = vsel %vm191, %v116, %v199
    %v208 = vsel %vm192, %v139, %v200
    %v209 = vsel %vm193, %v162, %v201
    %v210 = vsel %vm194, %v185, %v202
    %211 = vst [vmem:[#allocation8] sm:$0xff] %v203
    %212 = vst [vmem:[#allocation8 + $0x8] sm:$0xff] %v204
    %213 = vst [vmem:[#allocation8 + $0x10] sm:$0xff] %v205
    %vm214 = vcmask 130048
    %215 = vst.msk [vmem:[#allocation8 + $0x18] sm:$0xff] %vm214, %v206
    %216 = vst [vmem:[#allocation8 + $0x20] sm:$0xff] %v207
    %217 = vst [vmem:[#allocation8 + $0x28] sm:$0xff] %v208
    %218 = vst [vmem:[#allocation8 + $0x30] sm:$0xff] %v209
    %219 = vst.msk [vmem:[#allocation8 + $0x38] sm:$0xff] %vm214, %v210
    // Predicated region
    $region26: #{tpu_custom_call.1} parent=1 // pred_check
      _
    $region27: #{tpu_custom_call.1} parent=1 // pred_check_branch
      %221 = sbr.rel (0) target = $region29
    $region28: #{tpu_custom_call.1} parent=1 // pred_region
      %223 = vsyncadd [#allocation4], 0
      %s224 = sshll.u32 [#allocation8], 4
      %s225 = int_to_ptr.vmem [resolvable:$true] %s224
      %s226 = sshll.u32 %s3, 4
      %s227 = int_to_ptr.hbm [resolvable:$true] %s226
      %232 = dma.vmem_to_hbm [thread:$0]  %s225, 1024, %s227, [#allocation4], 512, 512, 32
    $region29: #{tpu_custom_call.1} parent=1 // pred_fallthru
      _
    // Predicated region
    $region30: #{tpu_custom_call.1} parent=1 // pred_check
      _
    $region31: #{tpu_custom_call.1} parent=1 // pred_check_branch
      %234 = sbr.rel (0) target = $region33
    $region32: #{tpu_custom_call.1} parent=1 // pred_region
      %236 = dma.done [#allocation4], 1024
    $region33: #{tpu_custom_call.1} parent=1 // pred_fallthru
      _
    %237 = vsyncpa [#allocation3], 1
    %238 = vsyncpa [#allocation6], 1
    %239 = vsyncpa [#allocation4], 1

</llo_original>
